<compile_context>
chip_gen: v5e
topology: v5e:2x2
jax: 0.10.0
libtpu: 0.0.40
codegen_flags: <defaults>
</compile_context>

<pallas_src>
import math

import jax
import jax.numpy as jnp
from jax.experimental import pallas as pl
from jax.experimental.pallas import tpu as pltpu


def _splitter_kernel(x_ref, w1_ref, b1_ref, w2_ref, b2_ref, o_ref):
    # x_ref:  (B, C)        -- same block every grid step (stays resident in VMEM)
    # w1_ref: (1, C, Hd)    -- head w's first linear, already (in, out) layout
    # b1_ref: (1, 1, Hd)
    # w2_ref: (1, Hd, D2)   -- head w's second linear, already (in, out) layout
    # b2_ref: (1, 1, D2)
    # o_ref:  (1, B, D2)
    x = x_ref[...]
    w1 = w1_ref[0]                      # (C, Hd)
    w2 = w2_ref[0]                      # (Hd, D2)

    # First linear: h = x @ W1^T + b1   (W1^T pre-materialized wrapper-side)
    h = jnp.dot(x, w1,
                preferred_element_type=jnp.float32,
                precision=jax.lax.Precision.HIGHEST)
    h = h + b1_ref[0].astype(jnp.float32)           # (B, Hd) + (1, Hd)

    # Second linear: y = h @ W2^T + b2
    y = jnp.dot(h.astype(w2.dtype), w2,
                preferred_element_type=jnp.float32,
                precision=jax.lax.Precision.HIGHEST)
    y = y + b2_ref[0].astype(jnp.float32)           # (B, D2) + (1, D2)

    o_ref[0] = y.astype(o_ref.dtype)


def single_layer_splitter(x, w1, b1, w2, b2, num_style_vectors, w_space_dim):
    """Pallas equivalent of SingleLayerSplitter.forward.

    Args:
      x:  (B, out_channels)
      w1: (num_ws, hidden, out_channels)              -- PyTorch Linear weight layout
      b1: (num_ws, hidden)
      w2: (num_ws, num_style_vectors*w_space_dim, hidden)
      b2: (num_ws, num_style_vectors*w_space_dim)
    Returns:
      (B, num_ws * num_style_vectors, w_space_dim)
    """
    B, C = x.shape
    num_ws, Hd, _ = w1.shape
    D2 = num_style_vectors * w_space_dim
    assert w2.shape == (num_ws, D2, Hd)

    # Layout plumbing only (done once, outside the kernel): transpose weights to
    # (in, out) so the kernel issues straight MXU matmuls, and lift biases to 3-D
    # so their blocks equal the full trailing dims (no sublane-padding surprises).
    w1_t = jnp.transpose(w1, (0, 2, 1))              # (num_ws, C, Hd)
    w2_t = jnp.transpose(w2, (0, 2, 1))              # (num_ws, Hd, D2)
    b1_r = b1.reshape(num_ws, 1, Hd)
    b2_r = b2.reshape(num_ws, 1, D2)

    out3 = pl.pallas_call(
        _splitter_kernel,
        out_shape=jax.ShapeDtypeStruct((num_ws, B, D2), x.dtype),
        grid_spec=pltpu.PrefetchScalarGridSpec(
            num_scalar_prefetch=0,
            grid=(num_ws,),
            in_specs=[
                pl.BlockSpec((B, C), lambda w: (0, 0)),          # x (resident)
                pl.BlockSpec((1, C, Hd), lambda w: (w, 0, 0)),   # W1^T per head
                pl.BlockSpec((1, 1, Hd), lambda w: (w, 0, 0)),   # b1 per head
                pl.BlockSpec((1, Hd, D2), lambda w: (w, 0, 0)),  # W2^T per head
                pl.BlockSpec((1, 1, D2), lambda w: (w, 0, 0)),   # b2 per head
            ],
            out_specs=pl.BlockSpec((1, B, D2), lambda w: (w, 0, 0)),
        ),
        compiler_params=pltpu.CompilerParams(
            dimension_semantics=("parallel",),
        ),
    )(x, w1_t, b1_r, w2_t, b2_r)

    # torch.cat([y_w.reshape(-1, nsv, wsd) for w], dim=1)  -> pure reshape/transpose
    out = out3.reshape(num_ws, B, num_style_vectors, w_space_dim)
    out = jnp.transpose(out, (1, 0, 2, 3))
    return out.reshape(B, num_ws * num_style_vectors, w_space_dim)


def _reference(x, w1, b1, w2, b2, nsv, wsd):
    outs = []
    for w in range(w1.shape[0]):
        h = jnp.einsum("bc,hc->bh", x, w1[w], precision="highest") + b1[w]
        y = jnp.einsum("bh,dh->bd", h, w2[w], precision="highest") + b2[w]
        outs.append(y.reshape(x.shape[0], nsv, wsd))
    return jnp.concatenate(outs, axis=1)


if __name__ == "__main__":
    key = jax.random.PRNGKey(0)

    # Small shapes consistent with the module's forward.
    B = 2
    out_channels = 32
    num_ws = 2
    num_style_vectors = 4
    w_space_dim = 8
    hidden = out_channels // num_ws
    D2 = num_style_vectors * w_space_dim

    kx, k1, k2, kb1, kb2 = jax.random.split(key, 5)
    x = jax.random.normal(kx, (B, out_channels), dtype=jnp.float32)
    # PyTorch-style init: N(0,1)/sqrt(fan_in). Module inits biases to zero, but
    # use small random biases here to exercise the full forward path.
    w1 = jax.random.normal(k1, (num_ws, hidden, out_channels), jnp.float32) / math.sqrt(out_channels)
    w2 = jax.random.normal(k2, (num_ws, D2, hidden), jnp.float32) / math.sqrt(hidden)
    b1 = 0.1 * jax.random.normal(kb1, (num_ws, hidden), jnp.float32)
    b2 = 0.1 * jax.random.normal(kb2, (num_ws, D2), jnp.float32)

    out = single_layer_splitter(x, w1, b1, w2, b2, num_style_vectors, w_space_dim)
    out = jax.block_until_ready(out)

    ref = _reference(x, w1, b1, w2, b2, num_style_vectors, w_space_dim)
    assert out.shape == (B, num_ws * num_style_vectors, w_space_dim), out.shape
    assert jnp.allclose(out, ref, atol=1e-4, rtol=1e-4), float(jnp.max(jnp.abs(out - ref)))

    print("KERNEL_OK")
</pallas_src>

<mosaic_0001>
module attributes {stable_mosaic.version = 11 : i64} {
  func.func @_splitter_kernel(%arg0: i32, %arg1: memref<2x32xf32, #tpu.memory_space<vmem>>, %arg2: memref<1x32x16xf32, #tpu.memory_space<vmem>>, %arg3: memref<1x1x16xf32, #tpu.memory_space<vmem>>, %arg4: memref<1x16x32xf32, #tpu.memory_space<vmem>>, %arg5: memref<1x1x32xf32, #tpu.memory_space<vmem>>, %arg6: memref<1x2x32xf32, #tpu.memory_space<vmem>>) attributes {dimension_semantics = [#tpu.dimension_semantics<parallel>], iteration_bounds = array<i64: 2>, scalar_prefetch = 0 : i64, scratch_operands = 0 : i64, tpu.core_type = #tpu.core_type<tc>, window_params = [{pipeline_mode = #tpu.pipeline_mode<synchronous>, transform_indices = @transform_0, window_bounds = array<i64: 2, 32>}, {transform_indices = @transform_1, window_bounds = array<i64: 1, 32, 16>}, {transform_indices = @transform_2, window_bounds = array<i64: 1, 1, 16>}, {transform_indices = @transform_3, window_bounds = array<i64: 1, 16, 32>}, {transform_indices = @transform_4, window_bounds = array<i64: 1, 1, 32>}, {transform_indices = @transform_5, window_bounds = array<i64: 1, 2, 32>}]} {
    %c0 = arith.constant 0 : index
    %c0_0 = arith.constant 0 : index
    %0 = vector.load %arg1[%c0, %c0_0] : memref<2x32xf32, #tpu.memory_space<vmem>>, vector<2x32xf32>
    %c0_1 = arith.constant 0 : index
    %c0_2 = arith.constant 0 : index
    %c0_3 = arith.constant 0 : index
    %1 = vector.load %arg2[%c0_1, %c0_2, %c0_3] : memref<1x32x16xf32, #tpu.memory_space<vmem>>, vector<1x32x16xf32>
    %2 = vector.shape_cast %1 : vector<1x32x16xf32> to vector<32x16xf32>
    %c0_4 = arith.constant 0 : index
    %c0_5 = arith.constant 0 : index
    %c0_6 = arith.constant 0 : index
    %3 = vector.load %arg4[%c0_4, %c0_5, %c0_6] : memref<1x16x32xf32, #tpu.memory_space<vmem>>, vector<1x16x32xf32>
    %4 = vector.shape_cast %3 : vector<1x16x32xf32> to vector<16x32xf32>
    %cst = arith.constant dense<0.000000e+00> : vector<2x16xf32>
    %5 = tpu.matmul %0, %2, %cst {dimension_numbers = #tpu.dot_dimension_numbers<[1], [0], [0], [1], [0, 0, 1, 1], [], []>, precision = #tpu.contract_precision<fp32>} : vector<2x32xf32>, vector<32x16xf32>, vector<2x16xf32> -> vector<2x16xf32>
    %c0_7 = arith.constant 0 : index
    %c0_8 = arith.constant 0 : index
    %c0_9 = arith.constant 0 : index
    %6 = vector.load %arg3[%c0_7, %c0_8, %c0_9] : memref<1x1x16xf32, #tpu.memory_space<vmem>>, vector<1x1x16xf32>
    %7 = vector.shape_cast %6 : vector<1x1x16xf32> to vector<1x16xf32>
    %8 = vector.broadcast %7 : vector<1x16xf32> to vector<2x16xf32>
    %9 = arith.addf %5, %8 : vector<2x16xf32>
    %cst_10 = arith.constant dense<0.000000e+00> : vector<2x32xf32>
    %10 = tpu.matmul %9, %4, %cst_10 {dimension_numbers = #tpu.dot_dimension_numbers<[1], [0], [0], [1], [0, 0, 1, 1], [], []>, precision = #tpu.contract_precision<fp32>} : vector<2x16xf32>, vector<16x32xf32>, vector<2x32xf32> -> vector<2x32xf32>
    %c0_11 = arith.constant 0 : index
    %c0_12 = arith.constant 0 : index
    %c0_13 = arith.constant 0 : index
    %11 = vector.load %arg5[%c0_11, %c0_12, %c0_13] : memref<1x1x32xf32, #tpu.memory_space<vmem>>, vector<1x1x32xf32>
    %12 = vector.shape_cast %11 : vector<1x1x32xf32> to vector<1x32xf32>
    %13 = vector.broadcast %12 : vector<1x32xf32> to vector<2x32xf32>
    %14 = arith.addf %10, %13 : vector<2x32xf32>
    %c0_14 = arith.constant 0 : index
    %c0_15 = arith.constant 0 : index
    %c0_16 = arith.constant 0 : index
    %15 = vector.load %arg6[%c0_14, %c0_15, %c0_16] : memref<1x2x32xf32, #tpu.memory_space<vmem>>, vector<1x2x32xf32>
    %16 = vector.shape_cast %15 : vector<1x2x32xf32> to vector<2x32xf32>
    %17 = vector.shape_cast %14 : vector<2x32xf32> to vector<1x2x32xf32>
    tpu.vector_store %arg6[%c0_14, %c0_15, %c0_16], %17 {strides = array<i32>} : memref<1x2x32xf32, #tpu.memory_space<vmem>>, vector<1x2x32xf32>,
    return
  }
  func.func @transform_0(%arg0: i32) -> (i32, i32) {
    %c0_i32 = arith.constant 0 : i32
    %c0_i32_0 = arith.constant 0 : i32
    %c0_i32_1 = arith.constant 0 : i32
    return %c0_i32, %c0_i32_0 : i32, i32
  }
  func.func @transform_1(%arg0: i32) -> (i32, i32, i32) {
    %c0_i32 = arith.constant 0 : i32
    %c0_i32_0 = arith.constant 0 : i32
    %c0_i32_1 = arith.constant 0 : i32
    return %arg0, %c0_i32, %c0_i32_0 : i32, i32, i32
  }
  func.func @transform_2(%arg0: i32) -> (i32, i32, i32) {
    %c0_i32 = arith.constant 0 : i32
    %c0_i32_0 = arith.constant 0 : i32
    %c0_i32_1 = arith.constant 0 : i32
    return %arg0, %c0_i32, %c0_i32_0 : i32, i32, i32
  }
  func.func @transform_3(%arg0: i32) -> (i32, i32, i32) {
    %c0_i32 = arith.constant 0 : i32
    %c0_i32_0 = arith.constant 0 : i32
    %c0_i32_1 = arith.constant 0 : i32
    return %arg0, %c0_i32, %c0_i32_0 : i32, i32, i32
  }
  func.func @transform_4(%arg0: i32) -> (i32, i32, i32) {
    %c0_i32 = arith.constant 0 : i32
    %c0_i32_0 = arith.constant 0 : i32
    %c0_i32_1 = arith.constant 0 : i32
    return %arg0, %c0_i32, %c0_i32_0 : i32, i32, i32
  }
  func.func @transform_5(%arg0: i32) -> (i32, i32, i32) {
    %c0_i32 = arith.constant 0 : i32
    %c0_i32_0 = arith.constant 0 : i32
    %c0_i32_1 = arith.constant 0 : i32
    return %arg0, %c0_i32, %c0_i32_0 : i32, i32, i32
  }
}

</mosaic_0001>

<llo_original>
// kernel: tpu_custom_call.1
$region0: #{tpu_custom_call.1}
  #allocation0 [shape = 'u32[]', space=smem, size = 0x4, offset = 0x4, fixed_abs, tag = 'smem constant byte address 0x4 - core index']
  #allocation1 [shape = 'u32[72,128]{1,0:T(1,128)}', space=vmem, size = 0x9000, scoped, tag = 'internal scratch']
  %s0 = inlined_call_operand.vmem [shape: f32[2,32], index: 0, kind: input, shape index: {}]
  %s1 = inlined_call_operand.vmem [shape: f32[2,32,16], index: 1, kind: input, shape index: {}]
  %s2 = inlined_call_operand.vmem [shape: f32[2,1,16], index: 2, kind: input, shape index: {}]
  %s3 = inlined_call_operand.vmem [shape: f32[2,16,32], index: 3, kind: input, shape index: {}]
  %s4 = inlined_call_operand.vmem [shape: f32[2,1,32], index: 4, kind: input, shape index: {}]
  %s5 = inlined_call_operand.hbm [shape: f32[2,2,32], index: 5, kind: output, shape index: {}]
  %s6 = sld [smem:[#allocation0]]
  $region53: #{tpu_custom_call.1} parent=0
    _
  %s8 = ssub.s32 1, %s6
  %s9 = scalar_select 0, %s8, %s6
  $region1: #{tpu_custom_call.1} parent=0
    #allocation2 [shape = 'u8[2048]{0}', space=vmem, size = 0x800, scoped, tag = 'output window, operand 0']
    #allocation3 [shape = 's32[2]{0}', space=sflag, size = 0x8, scoped, tag = 'scoped memory for tpu_custom_call.1']
    %10 = vsyncpa [#allocation3], 0
    %s11 = scalar_lea.sflag [#allocation3], 1
    %12 = vsyncpa %s11, 0
    loop: start=0, step=1, limit=4
    $region2: #{tpu_custom_call.1} parent=1 // loop_pre_header
      _
    $region3: #{tpu_custom_call.1} parent=1 // loop_header
      %s14 = sphi 0, %s18
      %p15 = scmp.ge.s32.totalorder %s14, 4
      %s22 = sphi 0, %s22
      %s24 = sphi 0, %s22
      %s25 = sphi 0, %s24
      %s39 = sphi 0, %s25
      %s45 = sphi 0, %s47
      %s48 = sphi 0, %s45
      %s49 = sphi 0, %s48
      %s65 = sphi 0, %s49
      %s71 = sphi 0, %s73
      %s74 = sphi 0, %s71
      %s75 = sphi 0, %s74
      %s91 = sphi 0, %s75
      %s97 = sphi 0, %s99
      %s100 = sphi 0, %s97
      %s101 = sphi 0, %s100
      %s117 = sphi 0, %s101
      %s123 = sphi 0, %s125
      %s126 = sphi 0, %s123
      %s127 = sphi 0, %s126
      %s143 = sphi 0, %s127
      %s149 = sphi 0, %s151
      %s152 = sphi 0, %s149
      %s153 = sphi 0, %s152
      %s169 = sphi 0, %s153
    $region4: #{tpu_custom_call.1} parent=1 // loop_header_branch
      %17 = sbr.rel (%p15) target = $region8
    $region5: #{tpu_custom_call.1} parent=1 // loop_body
      %s19 = ssub.s32 %s14, 1
      %s20 = ssub.s32 %s14, 2
      %s21 = sadd.s32 %s14, 1
      %s23 = sadd.s32 %s22, 1
      %p26 = scmp.eq.s32.totalorder %s14, 1
      %p27 = scmp.ne.s32.totalorder %s22, %s24
      %p28 = scmp.eq.s32.totalorder %s14, 0
      %p29 = por %p27, %p28
      %p30 = scmp.ne.s32.totalorder %s22, %s24
      %p31 = scmp.eq.s32.totalorder %s19, 1
      %p32 = por %p30, %p31
      %p33 = scmp.ne.s32.totalorder %s24, %s25
      %p34 = scmp.eq.s32.totalorder %s19, 0
      %p35 = por %p33, %p34
      %p36 = scmp.ne.s32.totalorder %s24, %s25
      %p37 = scmp.eq.s32.totalorder %s20, 1
      %p38 = por %p36, %p37
      %p40 = scmp.ne.s32.totalorder %s25, %s39
      %p41 = scmp.eq.s32.totalorder %s20, 0
      %p42 = por %p40, %p41
      %s43 = ssub.s32 %s14, %s21
      %p44 = scmp.eq.s32.totalorder %s43, 0
      %s46 = sadd.s32 %s45, 1
      %s47 = scalar_select %p44, %s45, %s46
      %p50 = pneg %p44
      %p51 = scmp.eq.s32.totalorder %s14, 1
      %p52 = por %p50, %p51
      %p53 = scmp.ne.s32.totalorder %s45, %s48
      %p54 = scmp.eq.s32.totalorder %s14, 0
      %p55 = por %p53, %p54
      %p56 = scmp.ne.s32.totalorder %s45, %s48
      %p57 = scmp.eq.s32.totalorder %s19, 1
      %p58 = por %p56, %p57
      %p59 = scmp.ne.s32.totalorder %s48, %s49
      %p60 = scmp.eq.s32.totalorder %s19, 0
      %p61 = por %p59, %p60
      %p62 = scmp.ne.s32.totalorder %s48, %s49
      %p63 = scmp.eq.s32.totalorder %s20, 1
      %p64 = por %p62, %p63
      %p66 = scmp.ne.s32.totalorder %s49, %s65
      %p67 = scmp.eq.s32.totalorder %s20, 0
      %p68 = por %p66, %p67
      %s69 = ssub.s32 %s14, %s21
      %p70 = scmp.eq.s32.totalorder %s69, 0
      %s72 = sadd.s32 %s71, 1
      %s73 = scalar_select %p70, %s71, %s72
      %p76 = pneg %p70
      %p77 = scmp.eq.s32.totalorder %s14, 1
      %p78 = por %p76, %p77
      %p79 = scmp.ne.s32.totalorder %s71, %s74
      %p80 = scmp.eq.s32.totalorder %s14, 0
      %p81 = por %p79, %p80
      %p82 = scmp.ne.s32.totalorder %s71, %s74
      %p83 = scmp.eq.s32.totalorder %s19, 1
      %p84 = por %p82, %p83
      %p85 = scmp.ne.s32.totalorder %s74, %s75
      %p86 = scmp.eq.s32.totalorder %s19, 0
      %p87 = por %p85, %p86
      %p88 = scmp.ne.s32.totalorder %s74, %s75
      %p89 = scmp.eq.s32.totalorder %s20, 1
      %p90 = por %p88, %p89
      %p92 = scmp.ne.s32.totalorder %s75, %s91
      %p93 = scmp.eq.s32.totalorder %s20, 0
      %p94 = por %p92, %p93
      %s95 = ssub.s32 %s14, %s21
      %p96 = scmp.eq.s32.totalorder %s95, 0
      %s98 = sadd.s32 %s97, 1
      %s99 = scalar_select %p96, %s97, %s98
      %p102 = pneg %p96
      %p103 = scmp.eq.s32.totalorder %s14, 1
      %p104 = por %p102, %p103
      %p105 = scmp.ne.s32.totalorder %s97, %s100
      %p106 = scmp.eq.s32.totalorder %s14, 0
      %p107 = por %p105, %p106
      %p108 = scmp.ne.s32.totalorder %s97, %s100
      %p109 = scmp.eq.s32.totalorder %s19, 1
      %p110 = por %p108, %p109
      %p111 = scmp.ne.s32.totalorder %s100, %s101
      %p112 = scmp.eq.s32.totalorder %s19, 0
      %p113 = por %p111, %p112
      %p114 = scmp.ne.s32.totalorder %s100, %s101
      %p115 = scmp.eq.s32.totalorder %s20, 1
      %p116 = por %p114, %p115
      %p118 = scmp.ne.s32.totalorder %s101, %s117
      %p119 = scmp.eq.s32.totalorder %s20, 0
      %p120 = por %p118, %p119
      %s121 = ssub.s32 %s14, %s21
      %p122 = scmp.eq.s32.totalorder %s121, 0
      %s124 = sadd.s32 %s123, 1
      %s125 = scalar_select %p122, %s123, %s124
      %p128 = pneg %p122
      %p129 = scmp.eq.s32.totalorder %s14, 1
      %p130 = por %p128, %p129
      %p131 = scmp.ne.s32.totalorder %s123, %s126
      %p132 = scmp.eq.s32.totalorder %s14, 0
      %p133 = por %p131, %p132
      %p134 = scmp.ne.s32.totalorder %s123, %s126
      %p135 = scmp.eq.s32.totalorder %s19, 1
      %p136 = por %p134, %p135
      %p137 = scmp.ne.s32.totalorder %s126, %s127
      %p138 = scmp.eq.s32.totalorder %s19, 0
      %p139 = por %p137, %p138
      %p140 = scmp.ne.s32.totalorder %s126, %s127
      %p141 = scmp.eq.s32.totalorder %s20, 1
      %p142 = por %p140, %p141
      %p144 = scmp.ne.s32.totalorder %s127, %s143
      %p145 = scmp.eq.s32.totalorder %s20, 0
      %p146 = por %p144, %p145
      %s147 = ssub.s32 %s14, %s21
      %p148 = scmp.eq.s32.totalorder %s147, 0
      %s150 = sadd.s32 %s149, 1
      %s151 = scalar_select %p148, %s149, %s150
      %p154 = pneg %p148
      %p155 = scmp.eq.s32.totalorder %s14, 1
      %p156 = por %p154, %p155
      %p157 = scmp.ne.s32.totalorder %s149, %s152
      %p158 = scmp.eq.s32.totalorder %s14, 0
      %p159 = por %p157, %p158
      %p160 = scmp.ne.s32.totalorder %s149, %s152
      %p161 = scmp.eq.s32.totalorder %s19, 1
      %p162 = por %p160, %p161
      %p163 = scmp.ne.s32.totalorder %s152, %s153
      %p164 = scmp.eq.s32.totalorder %s19, 0
      %p165 = por %p163, %p164
      %p166 = scmp.ne.s32.totalorder %s152, %s153
      %p167 = scmp.eq.s32.totalorder %s20, 1
      %p168 = por %p166, %p167
      %p170 = scmp.ne.s32.totalorder %s153, %s169
      %p171 = scmp.eq.s32.totalorder %s20, 0
      %p172 = por %p170, %p171
      %p173 = scmp.le.s32.totalorder 1, %s14
      %p174 = scmp.lt.s32.totalorder %s14, 3
      %p175 = pnand %p173, %p174
      %p176 = pneg %p175
      // Predicated region
      $region9: #{tpu_custom_call.1} parent=5 // pred_check
        _
      $region10: #{tpu_custom_call.1} parent=5 // pred_check_branch
        %178 = sbr.rel (%p175) target = $region12
      $region11: #{tpu_custom_call.1} parent=5 // pred_region
        %s179 = ssub.s32 %s14, 1
        // Predicated region
        $region13: #{tpu_custom_call.1} parent=11 // pred_check
          %p180 = pneg %p35
        $region14: #{tpu_custom_call.1} parent=11 // pred_check_branch
          %182 = sbr.rel (%p180) target = $region16
        $region15: #{tpu_custom_call.1} parent=11 // pred_region
          _
        $region16: #{tpu_custom_call.1} parent=11 // pred_fallthru
          _
      $region12: #{tpu_custom_call.1} parent=5 // pred_fallthru
        _
      %p183 = scmp.lt.s32.totalorder %s14, 2
      // Predicated region
      $region17: #{tpu_custom_call.1} parent=5 // pred_check
        %p184 = pneg %p183
      $region18: #{tpu_custom_call.1} parent=5 // pred_check_branch
        %186 = sbr.rel (%p184) target = $region20
      $region19: #{tpu_custom_call.1} parent=5 // pred_region
        // Predicated region
        $region21: #{tpu_custom_call.1} parent=19 // pred_check
          %p187 = pneg %p55
        $region22: #{tpu_custom_call.1} parent=19 // pred_check_branch
          %189 = sbr.rel (%p187) target = $region24
        $region23: #{tpu_custom_call.1} parent=19 // pred_region
          %p190 = scmp.lt.s32.totalorder %s14, 1
          %s191 = scalar_select %p190, %s14, 1
          %s192 = smul.addr %s191, 4
          %s193 = smul.addr %s192, 8
          %s194 = scalar_lea.vmem %s1, %s193
        $region24: #{tpu_custom_call.1} parent=19 // pred_fallthru
          _
        // Predicated region
        $region25: #{tpu_custom_call.1} parent=19 // pred_check
          %p195 = pneg %p81
        $region26: #{tpu_custom_call.1} parent=19 // pred_check_branch
          %197 = sbr.rel (%p195) target = $region28
        $region27: #{tpu_custom_call.1} parent=19 // pred_region
          %p198 = scmp.lt.s32.totalorder %s14, 1
          %s199 = scalar_select %p198, %s14, 1
          %s200 = scalar_lea.vmem %s2, %s199
        $region28: #{tpu_custom_call.1} parent=19 // pred_fallthru
          _
        // Predicated region
        $region29: #{tpu_custom_call.1} parent=19 // pred_check
          %p201 = pneg %p107
        $region30: #{tpu_custom_call.1} parent=19 // pred_check_branch
          %203 = sbr.rel (%p201) target = $region32
        $region31: #{tpu_custom_call.1} parent=19 // pred_region
          %p204 = scmp.lt.s32.totalorder %s14, 1
          %s205 = scalar_select %p204, %s14, 1
          %s206 = smul.addr %s205, 2
          %s207 = smul.addr %s206, 8
          %s208 = scalar_lea.vmem %s3, %s207
        $region32: #{tpu_custom_call.1} parent=19 // pred_fallthru
          _
        // Predicated region
        $region33: #{tpu_custom_call.1} parent=19 // pred_check
          %p209 = pneg %p133
        $region34: #{tpu_custom_call.1} parent=19 // pred_check_branch
          %211 = sbr.rel (%p209) target = $region36
        $region35: #{tpu_custom_call.1} parent=19 // pred_region
          %p212 = scmp.lt.s32.totalorder %s14, 1
          %s213 = scalar_select %p212, %s14, 1
          %s214 = scalar_lea.vmem %s4, %s213
        $region36: #{tpu_custom_call.1} parent=19 // pred_fallthru
          _
      $region20: #{tpu_custom_call.1} parent=5 // pred_fallthru
        _
      %p215 = scmp.le.s32.totalorder 1, %s14
      %p216 = scmp.lt.s32.totalorder %s14, 3
      %p217 = pnand %p215, %p216
      %p218 = pneg %p217
      // Predicated region
      $region37: #{tpu_custom_call.1} parent=5 // pred_check
        _
      $region38: #{tpu_custom_call.1} parent=5 // pred_check_branch
        %220 = sbr.rel (%p217) target = $region40
      $region39: #{tpu_custom_call.1} parent=5 // pred_region
        %s221 = ssub.s32 %s14, 1
        %p222 = pneg %p35
        %p223 = pneg %p32
        %p224 = scmp.lt.s32.totalorder %s19, 1
        %s225 = scalar_select %p224, %s19, 1
        %s226 = smul.addr %s225, 4
        %s227 = smul.addr %s226, 8
        %s228 = scalar_lea.vmem %s1, %s227
        %p229 = pneg %p61
        %p230 = pneg %p58
        %p231 = scmp.lt.s32.totalorder %s19, 1
        %s232 = scalar_select %p231, %s19, 1
        %s233 = scalar_lea.vmem %s2, %s232
        %p234 = pneg %p87
        %p235 = pneg %p84
        %p236 = scmp.lt.s32.totalorder %s19, 1
        %s237 = scalar_select %p236, %s19, 1
        %s238 = smul.addr %s237, 2
        %s239 = smul.addr %s238, 8
        %s240 = scalar_lea.vmem %s3, %s239
        %p241 = pneg %p113
        %p242 = pneg %p110
        %p243 = scmp.lt.s32.totalorder %s19, 1
        %s244 = scalar_select %p243, %s19, 1
        %s245 = scalar_lea.vmem %s4, %s244
        %p246 = pneg %p139
        %p247 = pneg %p136
        %p248 = pneg %p165
        %p249 = pneg %p162
        %s250 = sand.u32 %s152, 1
        %s251 = scalar_lea.sflag [#allocation3], %s250
        %s252 = sand.u32 %s152, 1
        %s253 = smul.addr %s252, 2
        %s254 = scalar_lea.vmem [#allocation2], %s253
        %p255 = scmp.lt.s32.totalorder %s19, 1
        %s256 = scalar_select %p255, %s19, 1
        %s257 = smul.addr %s256, 4
        %s258 = smul.addr %s257, 8
        %s259 = scalar_lea.vmem %s1, %s258
        %p260 = scmp.lt.s32.totalorder %s19, 1
        %s261 = scalar_select %p260, %s19, 1
        %s262 = scalar_lea.vmem %s2, %s261
        %p263 = scmp.lt.s32.totalorder %s19, 1
        %s264 = scalar_select %p263, %s19, 1
        %s265 = smul.addr %s264, 2
        %s266 = smul.addr %s265, 8
        %s267 = scalar_lea.vmem %s3, %s266
        %p268 = scmp.lt.s32.totalorder %s19, 1
        %s269 = scalar_select %p268, %s19, 1
        %s270 = scalar_lea.vmem %s4, %s269
        %v271 = vld [vmem:[%s0] sm:$0x3]
        %v272 = vld [vmem:[%s259] sm:$0xff]
        %v273 = vld [vmem:[%s259 + $0x8] sm:$0xff]
        %v274 = vld [vmem:[%s259 + $0x10] sm:$0xff]
        %v275 = vld [vmem:[%s259 + $0x18] sm:$0xff]
        %v276 = vld [vmem:[%s267] sm:$0xff]
        %v277 = vld [vmem:[%s267 + $0x8] sm:$0xff]
        %v278 = vld [vmem:[%s262] sm:$0x1]
        %v280 = vperm.slane %v278, 0
        %vm282 = vcmask 261120
        %v284 = vsel %vm282, %v271, 0
        %286 = vmatpush.msra.mxu0 0.0
        %287 = vmatpush.msra.mxu0 0.0
        %288 = vmatpush.msra.mxu0 0.0
        %289 = vmatpush.msra.mxu0 0.0
        %290 = vmatpush.msra.mxu0 0.0
        %291 = vmatpush.msra.mxu0 0.0
        %292 = vmatpush.msra.mxu0 0.0
        %293 = vmatpush.msra.mxu0 0.0
        %294 = vmatpush.msra.mxu0 0.0
        %295 = vmatpush.msra.mxu0 0.0
        %296 = vmatpush.msra.mxu0 0.0
        %297 = vmatpush.msra.mxu0 0.0
        %v298 = vand.u32 %v275, 4294901760
        %299 = vmatpush.msra.mxu0 %v298
        %v300 = vand.u32 %v274, 4294901760
        %301 = vmatpush.msra.mxu0 %v300
        %v302 = vand.u32 %v273, 4294901760
        %303 = vmatpush.msra.mxu0 %v302
        %v304 = vand.u32 %v272, 4294901760
        %305 = vmatpush.msra.mxu0 %v304
        %v306 = vand.u32 %v284, 4294901760
        %v307 = vsub.f32 %v284, %v306
        %v308 = vand.u32 %v307, 4294901760
        %v309 = vsub.f32 %v307, %v308
        %v310 = vand.u32 %v309, 4294901760
        %311 = vmatmul.f32.gmra.mxu0 %v310
        %v312 = vpop.f32.mrf.mxu0
        %v313 = vadd.f32 %v280, %v312
        %314 = vdwg.mxu0
        %315 = vmatpush.msra.mxu0 0.0
        %316 = vmatpush.msra.mxu0 0.0
        %317 = vmatpush.msra.mxu0 0.0
        %318 = vmatpush.msra.mxu0 0.0
        %319 = vmatpush.msra.mxu0 0.0
        %320 = vmatpush.msra.mxu0 0.0
        %321 = vmatpush.msra.mxu0 0.0
        %322 = vmatpush.msra.mxu0 0.0
        %323 = vmatpush.msra.mxu0 0.0
        %324 = vmatpush.msra.mxu0 0.0
        %325 = vmatpush.msra.mxu0 0.0
        %326 = vmatpush.msra.mxu0 0.0
        %v327 = vand.u32 %v275, 4294901760
        %v328 = vsub.f32 %v275, %v327
        %v329 = vand.u32 %v328, 4294901760
        %v330 = vsub.f32 %v328, %v329
        %v331 = vand.u32 %v330, 4294901760
        %332 = vmatpush.msra.mxu0 %v331
        %v333 = vand.u32 %v274, 4294901760
        %v334 = vsub.f32 %v274, %v333
        %v335 = vand.u32 %v334, 4294901760
        %v336 = vsub.f32 %v334, %v335
        %v337 = vand.u32 %v336, 4294901760
        %338 = vmatpush.msra.mxu0 %v337
        %v339 = vand.u32 %v273, 4294901760
        %v340 = vsub.f32 %v273, %v339
        %v341 = vand.u32 %v340, 4294901760
        %v342 = vsub.f32 %v340, %v341
        %v343 = vand.u32 %v342, 4294901760
        %344 = vmatpush.msra.mxu0 %v343
        %v345 = vand.u32 %v272, 4294901760
        %v346 = vsub.f32 %v272, %v345
        %v347 = vand.u32 %v346, 4294901760
        %v348 = vsub.f32 %v346, %v347
        %v349 = vand.u32 %v348, 4294901760
        %350 = vmatpush.msra.mxu0 %v349
        %v351 = vand.u32 %v284, 4294901760
        %352 = vmatmul.f32.gmra.mxu0 %v351
        %v353 = vpop.f32.mrf.mxu0
        %v354 = vadd.f32 %v313, %v353
        %355 = vdwg.mxu0
        %356 = vmatpush.msra.mxu0 0.0
        %357 = vmatpush.msra.mxu0 0.0
        %358 = vmatpush.msra.mxu0 0.0
        %359 = vmatpush.msra.mxu0 0.0
        %360 = vmatpush.msra.mxu0 0.0
        %361 = vmatpush.msra.mxu0 0.0
        %362 = vmatpush.msra.mxu0 0.0
        %363 = vmatpush.msra.mxu0 0.0
        %364 = vmatpush.msra.mxu0 0.0
        %365 = vmatpush.msra.mxu0 0.0
        %366 = vmatpush.msra.mxu0 0.0
        %367 = vmatpush.msra.mxu0 0.0
        %v368 = vand.u32 %v275, 4294901760
        %v369 = vsub.f32 %v275, %v368
        %370 = vmatpush.msra.mxu0 %v369
        %v371 = vand.u32 %v274, 4294901760
        %v372 = vsub.f32 %v274, %v371
        %373 = vmatpush.msra.mxu0 %v372
        %v374 = vand.u32 %v273, 4294901760
        %v375 = vsub.f32 %v273, %v374
        %376 = vmatpush.msra.mxu0 %v375
        %v377 = vand.u32 %v272, 4294901760
        %v378 = vsub.f32 %v272, %v377
        %379 = vmatpush.msra.mxu0 %v378
        %v380 = vand.u32 %v284, 4294901760
        %v381 = vsub.f32 %v284, %v380
        %382 = vmatmul.f32.gmra.mxu0 %v381
        %v383 = vpop.f32.mrf.mxu0
        %v384 = vadd.f32 %v354, %v383
        %385 = vdwg.mxu0
        %386 = vmatpush.msra.mxu0 0.0
        %387 = vmatpush.msra.mxu0 0.0
        %388 = vmatpush.msra.mxu0 0.0
        %389 = vmatpush.msra.mxu0 0.0
        %390 = vmatpush.msra.mxu0 0.0
        %391 = vmatpush.msra.mxu0 0.0
        %392 = vmatpush.msra.mxu0 0.0
        %393 = vmatpush.msra.mxu0 0.0
        %394 = vmatpush.msra.mxu0 0.0
        %395 = vmatpush.msra.mxu0 0.0
        %396 = vmatpush.msra.mxu0 0.0
        %397 = vmatpush.msra.mxu0 0.0
        %v398 = vand.u32 %v275, 4294901760
        %399 = vmatpush.msra.mxu0 %v398
        %v400 = vand.u32 %v274, 4294901760
        %401 = vmatpush.msra.mxu0 %v400
        %v402 = vand.u32 %v273, 4294901760
        %403 = vmatpush.msra.mxu0 %v402
        %v404 = vand.u32 %v272, 4294901760
        %405 = vmatpush.msra.mxu0 %v404
        %v406 = vand.u32 %v284, 4294901760
        %v407 = vsub.f32 %v284, %v406
        %v408 = vand.u32 %v407, 4294901760
        %409 = vmatmul.f32.gmra.mxu0 %v408
        %v410 = vpop.f32.mrf.mxu0
        %v411 = vadd.f32 %v384, %v410
        %412 = vdwg.mxu0
        %413 = vmatpush.msra.mxu0 0.0
        %414 = vmatpush.msra.mxu0 0.0
        %415 = vmatpush.msra.mxu0 0.0
        %416 = vmatpush.msra.mxu0 0.0
        %417 = vmatpush.msra.mxu0 0.0
        %418 = vmatpush.msra.mxu0 0.0
        %419 = vmatpush.msra.mxu0 0.0
        %420 = vmatpush.msra.mxu0 0.0
        %421 = vmatpush.msra.mxu0 0.0
        %422 = vmatpush.msra.mxu0 0.0
        %423 = vmatpush.msra.mxu0 0.0
        %424 = vmatpush.msra.mxu0 0.0
        %v425 = vand.u32 %v275, 4294901760
        %v426 = vsub.f32 %v275, %v425
        %v427 = vand.u32 %v426, 4294901760
        %428 = vmatpush.msra.mxu0 %v427
        %v429 = vand.u32 %v274, 4294901760
        %v430 = vsub.f32 %v274, %v429
        %v431 = vand.u32 %v430, 4294901760
        %432 = vmatpush.msra.mxu0 %v431
        %v433 = vand.u32 %v273, 4294901760
        %v434 = vsub.f32 %v273, %v433
        %v435 = vand.u32 %v434, 4294901760
        %436 = vmatpush.msra.mxu0 %v435
        %v437 = vand.u32 %v272, 4294901760
        %v438 = vsub.f32 %v272, %v437
        %v439 = vand.u32 %v438, 4294901760
        %440 = vmatpush.msra.mxu0 %v439
        %v441 = vand.u32 %v284, 4294901760
        %442 = vmatmul.f32.gmra.mxu0 %v441
        %v443 = vpop.f32.mrf.mxu0
        %v444 = vadd.f32 %v411, %v443
        %445 = vdwg.mxu0
        %446 = vmatpush.msra.mxu0 0.0
        %447 = vmatpush.msra.mxu0 0.0
        %448 = vmatpush.msra.mxu0 0.0
        %449 = vmatpush.msra.mxu0 0.0
        %450 = vmatpush.msra.mxu0 0.0
        %451 = vmatpush.msra.mxu0 0.0
        %452 = vmatpush.msra.mxu0 0.0
        %453 = vmatpush.msra.mxu0 0.0
        %454 = vmatpush.msra.mxu0 0.0
        %455 = vmatpush.msra.mxu0 0.0
        %456 = vmatpush.msra.mxu0 0.0
        %457 = vmatpush.msra.mxu0 0.0
        %v458 = vand.u32 %v275, 4294901760
        %459 = vmatpush.msra.mxu0 %v458
        %v460 = vand.u32 %v274, 4294901760
        %461 = vmatpush.msra.mxu0 %v460
        %v462 = vand.u32 %v273, 4294901760
        %463 = vmatpush.msra.mxu0 %v462
        %v464 = vand.u32 %v272, 4294901760
        %465 = vmatpush.msra.mxu0 %v464
        %v466 = vand.u32 %v284, 4294901760
        %467 = vmatmul.f32.gmra.mxu0 %v466
        %v468 = vpop.f32.mrf.mxu0
        %v469 = vadd.f32 %v444, %v468
        %470 = vdwg.mxu0
        %v471 = vld [vmem:[%s270] sm:$0x1]
        %v473 = vperm.slane %v471, 0
        %vm475 = vcmask 130048
        %v477 = vsel %vm475, %v469, 0
        %479 = vmatpush.msra.mxu0 0.0
        %480 = vmatpush.msra.mxu0 0.0
        %481 = vmatpush.msra.mxu0 0.0
        %482 = vmatpush.msra.mxu0 0.0
        %483 = vmatpush.msra.mxu0 0.0
        %484 = vmatpush.msra.mxu0 0.0
        %485 = vmatpush.msra.mxu0 0.0
        %486 = vmatpush.msra.mxu0 0.0
        %487 = vmatpush.msra.mxu0 0.0
        %488 = vmatpush.msra.mxu0 0.0
        %489 = vmatpush.msra.mxu0 0.0
        %490 = vmatpush.msra.mxu0 0.0
        %491 = vmatpush.msra.mxu0 0.0
        %492 = vmatpush.msra.mxu0 0.0
        %v493 = vand.u32 %v277, 4294901760
        %494 = vmatpush.msra.mxu0 %v493
        %v495 = vand.u32 %v276, 4294901760
        %496 = vmatpush.msra.mxu0 %v495
        %v497 = vand.u32 %v477, 4294901760
        %v498 = vsub.f32 %v477, %v497
        %v499 = vand.u32 %v498, 4294901760
        %v500 = vsub.f32 %v498, %v499
        %v501 = vand.u32 %v500, 4294901760
        %502 = vmatmul.f32.gmra.mxu0 %v501
        %v503 = vpop.f32.mrf.mxu0
        %v504 = vadd.f32 %v473, %v503
        %505 = vdwg.mxu0
        %506 = vmatpush.msra.mxu0 0.0
        %507 = vmatpush.msra.mxu0 0.0
        %508 = vmatpush.msra.mxu0 0.0
        %509 = vmatpush.msra.mxu0 0.0
        %510 = vmatpush.msra.mxu0 0.0
        %511 = vmatpush.msra.mxu0 0.0
        %512 = vmatpush.msra.mxu0 0.0
        %513 = vmatpush.msra.mxu0 0.0
        %514 = vmatpush.msra.mxu0 0.0
        %515 = vmatpush.msra.mxu0 0.0
        %516 = vmatpush.msra.mxu0 0.0
        %517 = vmatpush.msra.mxu0 0.0
        %518 = vmatpush.msra.mxu0 0.0
        %519 = vmatpush.msra.mxu0 0.0
        %v520 = vand.u32 %v277, 4294901760
        %v521 = vsub.f32 %v277, %v520
        %v522 = vand.u32 %v521, 4294901760
        %v523 = vsub.f32 %v521, %v522
        %v524 = vand.u32 %v523, 4294901760
        %525 = vmatpush.msra.mxu0 %v524
        %v526 = vand.u32 %v276, 4294901760
        %v527 = vsub.f32 %v276, %v526
        %v528 = vand.u32 %v527, 4294901760
        %v529 = vsub.f32 %v527, %v528
        %v530 = vand.u32 %v529, 4294901760
        %531 = vmatpush.msra.mxu0 %v530
        %v532 = vand.u32 %v477, 4294901760
        %533 = vmatmul.f32.gmra.mxu0 %v532
        %v534 = vpop.f32.mrf.mxu0
        %v535 = vadd.f32 %v504, %v534
        %536 = vdwg.mxu0
        %537 = vmatpush.msra.mxu0 0.0
        %538 = vmatpush.msra.mxu0 0.0
        %539 = vmatpush.msra.mxu0 0.0
        %540 = vmatpush.msra.mxu0 0.0
        %541 = vmatpush.msra.mxu0 0.0
        %542 = vmatpush.msra.mxu0 0.0
        %543 = vmatpush.msra.mxu0 0.0
        %544 = vmatpush.msra.mxu0 0.0
        %545 = vmatpush.msra.mxu0 0.0
        %546 = vmatpush.msra.mxu0 0.0
        %547 = vmatpush.msra.mxu0 0.0
        %548 = vmatpush.msra.mxu0 0.0
        %549 = vmatpush.msra.mxu0 0.0
        %550 = vmatpush.msra.mxu0 0.0
        %v551 = vand.u32 %v277, 4294901760
        %v552 = vsub.f32 %v277, %v551
        %553 = vmatpush.msra.mxu0 %v552
        %v554 = vand.u32 %v276, 4294901760
        %v555 = vsub.f32 %v276, %v554
        %556 = vmatpush.msra.mxu0 %v555
        %v557 = vand.u32 %v477, 4294901760
        %v558 = vsub.f32 %v477, %v557
        %559 = vmatmul.f32.gmra.mxu0 %v558
        %v560 = vpop.f32.mrf.mxu0
        %v561 = vadd.f32 %v535, %v560
        %562 = vdwg.mxu0
        %563 = vmatpush.msra.mxu0 0.0
        %564 = vmatpush.msra.mxu0 0.0
        %565 = vmatpush.msra.mxu0 0.0
        %566 = vmatpush.msra.mxu0 0.0
        %567 = vmatpush.msra.mxu0 0.0
        %568 = vmatpush.msra.mxu0 0.0
        %569 = vmatpush.msra.mxu0 0.0
        %570 = vmatpush.msra.mxu0 0.0
        %571 = vmatpush.msra.mxu0 0.0
        %572 = vmatpush.msra.mxu0 0.0
        %573 = vmatpush.msra.mxu0 0.0
        %574 = vmatpush.msra.mxu0 0.0
        %575 = vmatpush.msra.mxu0 0.0
        %576 = vmatpush.msra.mxu0 0.0
        %v577 = vand.u32 %v277, 4294901760
        %578 = vmatpush.msra.mxu0 %v577
        %v579 = vand.u32 %v276, 4294901760
        %580 = vmatpush.msra.mxu0 %v579
        %v581 = vand.u32 %v477, 4294901760
        %v582 = vsub.f32 %v477, %v581
        %v583 = vand.u32 %v582, 4294901760
        %584 = vmatmul.f32.gmra.mxu0 %v583
        %v585 = vpop.f32.mrf.mxu0
        %v586 = vadd.f32 %v561, %v585
        %587 = vdwg.mxu0
        %588 = vmatpush.msra.mxu0 0.0
        %589 = vmatpush.msra.mxu0 0.0
        %590 = vmatpush.msra.mxu0 0.0
        %591 = vmatpush.msra.mxu0 0.0
        %592 = vmatpush.msra.mxu0 0.0
        %593 = vmatpush.msra.mxu0 0.0
        %594 = vmatpush.msra.mxu0 0.0
        %595 = vmatpush.msra.mxu0 0.0
        %596 = vmatpush.msra.mxu0 0.0
        %597 = vmatpush.msra.mxu0 0.0
        %598 = vmatpush.msra.mxu0 0.0
        %599 = vmatpush.msra.mxu0 0.0
        %600 = vmatpush.msra.mxu0 0.0
        %601 = vmatpush.msra.mxu0 0.0
        %v602 = vand.u32 %v277, 4294901760
        %v603 = vsub.f32 %v277, %v602
        %v604 = vand.u32 %v603, 4294901760
        %605 = vmatpush.msra.mxu0 %v604
        %v606 = vand.u32 %v276, 4294901760
        %v607 = vsub.f32 %v276, %v606
        %v608 = vand.u32 %v607, 4294901760
        %609 = vmatpush.msra.mxu0 %v608
        %v610 = vand.u32 %v477, 4294901760
        %611 = vmatmul.f32.gmra.mxu0 %v610
        %v612 = vpop.f32.mrf.mxu0
        %v613 = vadd.f32 %v586, %v612
        %614 = vdwg.mxu0
        %615 = vmatpush.msra.mxu0 0.0
        %616 = vmatpush.msra.mxu0 0.0
        %617 = vmatpush.msra.mxu0 0.0
        %618 = vmatpush.msra.mxu0 0.0
        %619 = vmatpush.msra.mxu0 0.0
        %620 = vmatpush.msra.mxu0 0.0
        %621 = vmatpush.msra.mxu0 0.0
        %622 = vmatpush.msra.mxu0 0.0
        %623 = vmatpush.msra.mxu0 0.0
        %624 = vmatpush.msra.mxu0 0.0
        %625 = vmatpush.msra.mxu0 0.0
        %626 = vmatpush.msra.mxu0 0.0
        %627 = vmatpush.msra.mxu0 0.0
        %628 = vmatpush.msra.mxu0 0.0
        %v629 = vand.u32 %v277, 4294901760
        %630 = vmatpush.msra.mxu0 %v629
        %v631 = vand.u32 %v276, 4294901760
        %632 = vmatpush.msra.mxu0 %v631
        %v633 = vand.u32 %v477, 4294901760
        %634 = vmatmul.f32.gmra.mxu0 %v633
        %v635 = vpop.f32.mrf.mxu0
        %v636 = vadd.f32 %v613, %v635
        %637 = vdwg.mxu0
        %vm638 = vcmask 254976
        %639 = vst.msk [vmem:[%s254] sm:$0x3] %vm638, %v636
        %s640 = sand.u32 %s152, 1
        %s641 = scalar_lea.sflag [#allocation3], %s640
        %s642 = sand.u32 %s152, 1
        %s643 = smul.addr %s642, 2
        %s644 = scalar_lea.vmem [#allocation2], %s643
        // Predicated region
        $region41: #{tpu_custom_call.1} parent=39 // pred_check
          %p645 = pneg %p162
        $region42: #{tpu_custom_call.1} parent=39 // pred_check_branch
          %647 = sbr.rel (%p645) target = $region44
        $region43: #{tpu_custom_call.1} parent=39 // pred_region
          %649 = vsyncadd %s641, 0
          %s650 = smul.addr %s19, 2
          %s651 = scalar_lea.hbm %s5, %s650
          %s653 = sshll.u32 %s644, 4
          %s654 = int_to_ptr.vmem [resolvable:$true] %s653
          %s655 = sshll.u32 %s651, 4
          %s656 = int_to_ptr.hbm [resolvable:$true] %s655
          %658 = dma.vmem_to_hbm [thread:$0]  %s654, 32, %s656, %s641
        $region44: #{tpu_custom_call.1} parent=39 // pred_fallthru
          _
      $region40: #{tpu_custom_call.1} parent=5 // pred_fallthru
        _
      %p659 = scmp.le.s32.totalorder 2, %s14
      // Predicated region
      $region45: #{tpu_custom_call.1} parent=5 // pred_check
        %p660 = pneg %p659
      $region46: #{tpu_custom_call.1} parent=5 // pred_check_branch
        %662 = sbr.rel (%p660) target = $region48
      $region47: #{tpu_custom_call.1} parent=5 // pred_region
        %s663 = ssub.s32 %s14, 2
        // Predicated region
        $region49: #{tpu_custom_call.1} parent=47 // pred_check
          %p664 = pneg %p168
        $region50: #{tpu_custom_call.1} parent=47 // pred_check_branch
          %666 = sbr.rel (%p664) target = $region52
        $region51: #{tpu_custom_call.1} parent=47 // pred_region
          %s667 = sand.u32 %s153, 1
          %s668 = scalar_lea.sflag [#allocation3], %s667
          %s669 = sand.u32 %s153, 1
          %s670 = smul.addr %s669, 2
          %s671 = scalar_lea.vmem [#allocation2], %s670
          %673 = dma.done %s668, 32
        $region52: #{tpu_custom_call.1} parent=47 // pred_fallthru
          _
      $region48: #{tpu_custom_call.1} parent=5 // pred_fallthru
        _
    $region6: #{tpu_custom_call.1} parent=1 // loop_footer
      %s18 = sadd.s32 1, %s14
    $region7: #{tpu_custom_call.1} parent=1 // loop_footer_branch
      %13 = sbr.rel target = $region3
    $region8: #{tpu_custom_call.1} parent=1 // loop_exit
      _
    %674 = vsyncpa [#allocation3], 1
    %s675 = scalar_lea.sflag [#allocation3], 1
    %676 = vsyncpa %s675, 1

</llo_original>
